<compile_context>
chip_gen: v5e
topology: v5e:2x2
jax: 0.10.0
libtpu: 0.0.40
codegen_flags: <defaults>
</compile_context>

<pallas_src>
import functools

import jax
import jax.numpy as jnp
from jax.experimental import pallas as pl
from jax.experimental.pallas import tpu as pltpu


# --------------------------------------------------------------------------
# Kernel body
# --------------------------------------------------------------------------
def _int_pow(x, n: int):
    """x**n for a static integer n >= 1 via square-and-multiply."""
    acc = None
    base = x
    while n:
        if n & 1:
            acc = base if acc is None else acc * base
        n >>= 1
        if n:
            base = base * base
    return acc


def _envelope_kernel(x_ref, o_ref, *, p, a, b, c):
    # f32 compute: required on v5e (no bf16 VPU/EUP), free elsewhere since
    # this kernel sits well under the HBM roofline.
    x = x_ref[...].astype(jnp.float32)
    inv_x = pl.reciprocal(x, approx=False)          # exact: 1e-5 accuracy kept
    # Horner: a*x^(p-1) + b*x^p + c*x^(p+1) = x^(p-1) * (a + x*(b + c*x))
    poly = a + x * (b + c * x)
    if p > 1:                                       # skip x^0 multiply (exp==0)
        poly = _int_pow(x, p - 1) * poly
    # Single vselect instead of compare-cast + multiply.
    o_ref[...] = jnp.where(x < 1.0, inv_x + poly, 0.0).astype(o_ref.dtype)


# --------------------------------------------------------------------------
# Generation-aware defaults
# --------------------------------------------------------------------------
def _vmem_defaults():
    """(f32-tile byte budget, scoped vmem_limit_bytes) per TPU generation."""
    cap = None
    try:
        cap = getattr(pltpu.get_tpu_info(), "vmem_capacity_bytes", None)
    except Exception:
        cap = None
    if cap is None:
        cap = 64 << 20                      # conservative (v7x-sized) fallback
    if cap >= (96 << 20):                   # v5e / v6e: 128 MiB physical VMEM
        return 8 << 20, 96 << 20
    return 4 << 20, 48 << 20                # v7x: 64 MiB physical VMEM


def _poly_coeffs(exponent: int):
    p = exponent + 1
    a = -(p + 1) * (p + 2) / 2.0
    b = float(p * (p + 2))
    c = -p * (p + 1) / 2.0
    return p, a, b, c


# --------------------------------------------------------------------------
# 2-D path: (rows, D) with lane-dense last dim
# --------------------------------------------------------------------------
def _envelope_2d(x, exponent, *, block_bytes, vmem_limit_bytes, min_blocks):
    p, a, b, c = _poly_coeffs(exponent)
    R, D = x.shape
    itemsize = jnp.dtype(x.dtype).itemsize
    sub = 8 * (4 // itemsize)                       # sublane rows per packed tile
    block_elems = max(block_bytes // 4, sub * 128)  # budget in f32-equiv elements

    # Lane tiling: full-extent D unless a single sublane strip blows the budget.
    if sub * D <= block_elems:
        block_d = D
    else:
        block_d = max(128, (block_elems // sub) // 128 * 128)

    # Row tiling: as many rows as fit.
    rows_fit = max(sub, (block_elems // block_d) // sub * sub)
    block_rows = R if R <= rows_fit else rows_fit

    # Guarantee >= min_blocks grid steps for megacore sharding + DMA overlap
    # whenever the array is big enough to care.
    grid_d = pl.cdiv(D, block_d)
    total_bytes = R * D * itemsize
    if grid_d == 1 and total_bytes >= (1 << 20):
        target = -(-R // min_blocks)                       # ceil(R / min_blocks)
        target = max(sub, -(-target // sub) * sub)         # round up to `sub`
        block_rows = min(block_rows, target)
    grid_r = pl.cdiv(R, block_rows)

    kernel = functools.partial(_envelope_kernel, p=p, a=a, b=b, c=c)
    return pl.pallas_call(
        kernel,
        out_shape=jax.ShapeDtypeStruct((R, D), x.dtype),
        grid_spec=pltpu.PrefetchScalarGridSpec(
            num_scalar_prefetch=0,
            grid=(grid_r, grid_d),
            in_specs=[pl.BlockSpec((block_rows, block_d), lambda i, j: (i, j))],
            out_specs=pl.BlockSpec((block_rows, block_d), lambda i, j: (i, j)),
        ),
        compiler_params=pltpu.CompilerParams(
            dimension_semantics=("parallel", "parallel"),
            vmem_limit_bytes=vmem_limit_bytes),
    )(x)


# --------------------------------------------------------------------------
# 1-D path: flat edge-distance vectors, no pad/slice HBM copies
# --------------------------------------------------------------------------
def _envelope_1d(x, exponent, *, block_bytes, vmem_limit_bytes, min_blocks):
    p, a, b, c = _poly_coeffs(exponent)
    (N,) = x.shape
    itemsize = jnp.dtype(x.dtype).itemsize
    block_elems = max(1024, (block_bytes // 4) // 1024 * 1024)
    block_n = N if N <= block_elems else block_elems

    if N * itemsize >= (1 << 20):
        target = -(-N // min_blocks)                       # ceil(N / min_blocks)
        target = max(1024, -(-target // 1024) * 1024)      # round up to 8*128
        block_n = min(block_n, target)
    grid = (pl.cdiv(N, block_n),)

    kernel = functools.partial(_envelope_kernel, p=p, a=a, b=b, c=c)
    return pl.pallas_call(
        kernel,
        out_shape=jax.ShapeDtypeStruct((N,), x.dtype),
        grid_spec=pltpu.PrefetchScalarGridSpec(
            num_scalar_prefetch=0,
            grid=grid,
            in_specs=[pl.BlockSpec((block_n,), lambda i: (i,))],
            out_specs=pl.BlockSpec((block_n,), lambda i: (i,)),
        ),
        compiler_params=pltpu.CompilerParams(
            dimension_semantics=("parallel",),
            vmem_limit_bytes=vmem_limit_bytes),
    )(x)


# --------------------------------------------------------------------------
# Public wrapper: arbitrary shape, zero extra HBM copies
# --------------------------------------------------------------------------
def envelope(x, exponent: int, *, block_bytes=None, vmem_limit_bytes=None,
             min_blocks: int = 4):
    """DimeNet++ envelope cutoff, elementwise, any input shape.

    x == 0 produces inf (matches the PyTorch reference). Partial trailing
    blocks compute on padding lanes and are masked on writeback (safe for a
    pure elementwise op).
    """
    assert exponent >= 0
    if block_bytes is None or vmem_limit_bytes is None:
        def_bb, def_vl = _vmem_defaults()
        block_bytes = def_bb if block_bytes is None else block_bytes
        vmem_limit_bytes = def_vl if vmem_limit_bytes is None else vmem_limit_bytes
    kw = dict(block_bytes=block_bytes, vmem_limit_bytes=vmem_limit_bytes,
              min_blocks=min_blocks)

    if x.ndim == 0:
        return _envelope_1d(x.reshape(1), exponent, **kw).reshape(())
    if x.ndim == 1:
        return _envelope_1d(x, exponent, **kw)
    if x.ndim == 2:
        return _envelope_2d(x, exponent, **kw)
    # N-D: collapse leading dims into rows (free for row-major contiguous),
    # keep the last dim on lanes, restore on return.
    lead, D = x.shape[:-1], x.shape[-1]
    y = _envelope_2d(x.reshape(-1, D), exponent, **kw)
    return y.reshape(*lead, D)


def envelope_ref(x, exponent: int):
    """Pure-JAX reference, mirrors the PyTorch forward exactly."""
    p = exponent + 1
    a = -(p + 1) * (p + 2) / 2.0
    b = float(p * (p + 2))
    c = -p * (p + 1) / 2.0
    x_pow_p0 = x ** (p - 1)
    x_pow_p1 = x_pow_p0 * x
    x_pow_p2 = x_pow_p1 * x
    grad_checker = (x < 1.0).astype(x.dtype)
    return (1.0 / x + a * x_pow_p0 + b * x_pow_p1 + c * x_pow_p2) * grad_checker


if __name__ == "__main__":
    exponent = 5  # DimeNet++ default envelope exponent

    key = jax.random.PRNGKey(0)
    k1, k2, k3, k4 = jax.random.split(key, 4)

    # 2-D lane-dense f32 input (strictly > 0 distances).
    x = jax.random.uniform(k1, (16, 256), jnp.float32, 0.05, 1.2)
    y = jax.block_until_ready(envelope(x, exponent))
    assert y.shape == x.shape and y.dtype == x.dtype
    assert jnp.allclose(y, envelope_ref(x, exponent), rtol=1e-5, atol=1e-5), \
        float(jnp.max(jnp.abs(y - envelope_ref(x, exponent))))

    # exponent = 0 edge case (p = 1; x^(p-1) factor skipped in-kernel).
    y0 = jax.block_until_ready(envelope(x, 0))
    assert jnp.allclose(y0, envelope_ref(x, 0), rtol=1e-5, atol=1e-5)

    # 1-D edge-distance vector: direct path, no pad/slice HBM copies.
    xe = jax.random.uniform(k2, (300,), jnp.float32, 0.05, 1.2)
    ye = jax.block_until_ready(envelope(xe, exponent))
    assert ye.shape == xe.shape and bool(jnp.all(jnp.isfinite(ye)))
    assert jnp.allclose(ye, envelope_ref(xe, exponent), rtol=1e-5, atol=1e-5)

    # 1-D multi-block path with a masked partial trailing block (forced small
    # blocks to exercise the pipeline at small test sizes).
    xm = jax.random.uniform(k3, (3000,), jnp.float32, 0.05, 1.2)
    ym = jax.block_until_ready(envelope(xm, exponent, block_bytes=4096))
    assert jnp.allclose(ym, envelope_ref(xm, exponent), rtol=1e-5, atol=1e-5)

    # 2-D multi-row-block path + bf16 I/O (f32 compute inside the kernel).
    xb = jax.random.uniform(k4, (64, 256), jnp.float32, 0.05, 1.2
                            ).astype(jnp.bfloat16)
    yb = jax.block_until_ready(envelope(xb, exponent, block_bytes=32 * 1024))
    yb_ref = envelope_ref(xb.astype(jnp.float32), exponent).astype(jnp.bfloat16)
    assert yb.dtype == jnp.bfloat16
    assert jnp.allclose(yb.astype(jnp.float32), yb_ref.astype(jnp.float32),
                        rtol=5e-2, atol=5e-2)

    # 4-D input: leading dims collapsed into rows (free reshape), restored.
    x4 = jax.random.uniform(k1, (2, 4, 16, 16), jnp.float32, 0.05, 1.2)
    y4 = jax.block_until_ready(envelope(x4, exponent))
    assert y4.shape == x4.shape
    assert jnp.allclose(y4, envelope_ref(x4, exponent), rtol=1e-5, atol=1e-5)

    print("KERNEL_OK")
</pallas_src>

<mosaic_0001>
module attributes {stable_mosaic.version = 11 : i64} {
  func.func @_envelope_kernel(%arg0: i32, %arg1: i32, %arg2: memref<16x256xf32, #tpu.memory_space<vmem>>, %arg3: memref<16x256xf32, #tpu.memory_space<vmem>>) attributes {dimension_semantics = [#tpu.dimension_semantics<parallel>, #tpu.dimension_semantics<parallel>], iteration_bounds = array<i64: 1, 1>, scalar_prefetch = 0 : i64, scratch_operands = 0 : i64, tpu.core_type = #tpu.core_type<tc>, window_params = [{transform_indices = @transform_0, window_bounds = array<i64: 16, 256>}, {transform_indices = @transform_1, window_bounds = array<i64: 16, 256>}]} {
    %c0 = arith.constant 0 : index
    %c0_0 = arith.constant 0 : index
    %0 = vector.load %arg2[%c0, %c0_0] : memref<16x256xf32, #tpu.memory_space<vmem>>, vector<16x256xf32>
    %1 = tpu.reciprocal %0 : vector<16x256xf32> -> vector<16x256xf32>
    %cst = arith.constant -2.100000e+01 : f32
    %2 = vector.broadcast %cst : f32 to vector<16x256xf32>
    %3 = arith.mulf %2, %0 : vector<16x256xf32>
    %cst_1 = arith.constant 4.800000e+01 : f32
    %4 = vector.broadcast %cst_1 : f32 to vector<16x256xf32>
    %5 = arith.addf %4, %3 : vector<16x256xf32>
    %6 = arith.mulf %0, %5 : vector<16x256xf32>
    %cst_2 = arith.constant -2.800000e+01 : f32
    %7 = vector.broadcast %cst_2 : f32 to vector<16x256xf32>
    %8 = arith.addf %7, %6 : vector<16x256xf32>
    %9 = arith.mulf %0, %0 : vector<16x256xf32>
    %10 = arith.mulf %9, %9 : vector<16x256xf32>
    %11 = arith.mulf %0, %10 : vector<16x256xf32>
    %12 = arith.mulf %11, %8 : vector<16x256xf32>
    %cst_3 = arith.constant 1.000000e+00 : f32
    %13 = vector.broadcast %cst_3 : f32 to vector<16x256xf32>
    %14 = arith.cmpf olt, %0, %13 : vector<16x256xf32>
    %15 = arith.addf %1, %12 : vector<16x256xf32>
    %cst_4 = arith.constant 0.000000e+00 : f32
    %16 = vector.broadcast %cst_4 : f32 to vector<16x256xf32>
    %17 = arith.select %14, %15, %16 : vector<16x256xi1>, vector<16x256xf32>
    %c0_5 = arith.constant 0 : index
    %c0_6 = arith.constant 0 : index
    %18 = vector.load %arg3[%c0_5, %c0_6] : memref<16x256xf32, #tpu.memory_space<vmem>>, vector<16x256xf32>
    tpu.vector_store %arg3[%c0_5, %c0_6], %17 {strides = array<i32>} : memref<16x256xf32, #tpu.memory_space<vmem>>, vector<16x256xf32>,
    return
  }
  func.func @transform_0(%arg0: i32, %arg1: i32) -> (i32, i32) {
    %c0_i32 = arith.constant 0 : i32
    return %arg0, %arg1 : i32, i32
  }
  func.func @transform_1(%arg0: i32, %arg1: i32) -> (i32, i32) {
    %c0_i32 = arith.constant 0 : i32
    return %arg0, %arg1 : i32, i32
  }
}

</mosaic_0001>

<llo_original>
// kernel: tpu_custom_call.1
$region0: #{tpu_custom_call.1}
  #allocation0 [shape = 'u32[]', space=smem, size = 0x4, offset = 0x4, fixed_abs, tag = 'smem constant byte address 0x4 - core index']
  #allocation1 [shape = 'u32[72,128]{1,0:T(1,128)}', space=vmem, size = 0x9000, scoped, tag = 'internal scratch']
  %s0 = inlined_call_operand.hbm [shape: f32[16,256], index: 0, kind: input, shape index: {}]
  %s1 = inlined_call_operand.hbm [shape: f32[16,256], index: 1, kind: output, shape index: {}]
  %s2 = sld [smem:[#allocation0]]
  $region18: #{tpu_custom_call.1} parent=0
    _
  %s4 = ssub.s32 1, %s2
  %s5 = scalar_select 0, %s4, %s2
  $region1: #{tpu_custom_call.1} parent=0
    #allocation2 [shape = 'u8[16384]{0}', space=vmem, size = 0x4000, scoped, tag = 'input window, operand 0, single buffered']
    #allocation3 [shape = 's32[1]{0}', space=sflag, size = 0x4, scoped, tag = 'scoped memory for tpu_custom_call.1']
    #allocation4 [shape = 's32[1]{0}', space=sflag, size = 0x4, scoped, tag = 'scoped memory for tpu_custom_call.1']
    #allocation5 [shape = 'u8[16384]{0}', space=vmem, size = 0x4000, scoped, tag = 'output window, operand 0, single buffered']
    %6 = vsyncpa [#allocation3], 0
    %7 = vsyncpa [#allocation4], 0
    // Predicated region
    $region2: #{tpu_custom_call.1} parent=1 // pred_check
      _
    $region3: #{tpu_custom_call.1} parent=1 // pred_check_branch
      %9 = sbr.rel (0) target = $region5
    $region4: #{tpu_custom_call.1} parent=1 // pred_region
      %11 = vsyncadd [#allocation3], 0
      %s12 = sshll.u32 %s0, 4
      %s13 = int_to_ptr.hbm [resolvable:$true] %s12
      %s14 = sshll.u32 [#allocation2], 4
      %s15 = int_to_ptr.vmem [resolvable:$true] %s14
      %20 = dma.hbm_to_vmem [thread:$0]  %s13, 512, %s15, [#allocation3], 256, 256, 16
    $region5: #{tpu_custom_call.1} parent=1 // pred_fallthru
      _
    // Predicated region
    $region6: #{tpu_custom_call.1} parent=1 // pred_check
      _
    $region7: #{tpu_custom_call.1} parent=1 // pred_check_branch
      %22 = sbr.rel (0) target = $region9
    $region8: #{tpu_custom_call.1} parent=1 // pred_region
      %24 = dma.done [#allocation3], 512
    $region9: #{tpu_custom_call.1} parent=1 // pred_fallthru
      _
    %v25 = vld [vmem:[#allocation2] sm:$0xff]
    %v26 = vld [vmem:[#allocation2 + $0x8] sm:$0xff]
    %v27 = vld [vmem:[#allocation2 + $0x10] sm:$0xff]
    %v28 = vld [vmem:[#allocation2 + $0x18] sm:$0xff]
    %v29 = vrcp.pop %v25
    %v30 = vmul.f32 %v25, %v29
    %v31 = vsub.f32 1.0, %v30
    %v32 = vmul.f32 %v29, %v31
    %v33 = vadd.f32 %v29, %v32
    %vm34 = vweird.f32 %v25
    %vm35 = vweird.f32 %v29
    %vm36 = vmor %vm34, %vm35
    %v37 = vsel %vm36, %v29, %v33
    %v38 = vand.u32 2147483647, %v25
    %vm39 = vcmp.eq.f32.partialorder %v38, 8.507059e+37
    %v40 = vand.u32 %v25, 2147483648
    %v41 = vor.u32 1.1754944e-38, %v40
    %v42 = vsel %vm39, %v41, %v37
    %v43 = vrcp.pop %v26
    %v44 = vmul.f32 %v26, %v43
    %v45 = vsub.f32 1.0, %v44
    %v46 = vmul.f32 %v43, %v45
    %v47 = vadd.f32 %v43, %v46
    %vm48 = vweird.f32 %v26
    %vm49 = vweird.f32 %v43
    %vm50 = vmor %vm48, %vm49
    %v51 = vsel %vm50, %v43, %v47
    %v52 = vand.u32 2147483647, %v26
    %vm53 = vcmp.eq.f32.partialorder %v52, 8.507059e+37
    %v54 = vand.u32 %v26, 2147483648
    %v55 = vor.u32 1.1754944e-38, %v54
    %v56 = vsel %vm53, %v55, %v51
    %v57 = vrcp.pop %v27
    %v58 = vmul.f32 %v27, %v57
    %v59 = vsub.f32 1.0, %v58
    %v60 = vmul.f32 %v57, %v59
    %v61 = vadd.f32 %v57, %v60
    %vm62 = vweird.f32 %v27
    %vm63 = vweird.f32 %v57
    %vm64 = vmor %vm62, %vm63
    %v65 = vsel %vm64, %v57, %v61
    %v66 = vand.u32 2147483647, %v27
    %vm67 = vcmp.eq.f32.partialorder %v66, 8.507059e+37
    %v68 = vand.u32 %v27, 2147483648
    %v69 = vor.u32 1.1754944e-38, %v68
    %v70 = vsel %vm67, %v69, %v65
    %v71 = vrcp.pop %v28
    %v72 = vmul.f32 %v28, %v71
    %v73 = vsub.f32 1.0, %v72
    %v74 = vmul.f32 %v71, %v73
    %v75 = vadd.f32 %v71, %v74
    %vm76 = vweird.f32 %v28
    %vm77 = vweird.f32 %v71
    %vm78 = vmor %vm76, %vm77
    %v79 = vsel %vm78, %v71, %v75
    %v80 = vand.u32 2147483647, %v28
    %vm81 = vcmp.eq.f32.partialorder %v80, 8.507059e+37
    %v82 = vand.u32 %v28, 2147483648
    %v83 = vor.u32 1.1754944e-38, %v82
    %v84 = vsel %vm81, %v83, %v79
    %v85 = vmul.f32 %v25, -21.0
    %v86 = vmul.f32 %v26, -21.0
    %v87 = vmul.f32 %v27, -21.0
    %v88 = vmul.f32 %v28, -21.0
    %v89 = vadd.f32 %v85, 48.0
    %v90 = vadd.f32 %v86, 48.0
    %v91 = vadd.f32 %v87, 48.0
    %v92 = vadd.f32 %v88, 48.0
    %v93 = vmul.f32 %v25, %v89
    %v94 = vmul.f32 %v26, %v90
    %v95 = vmul.f32 %v27, %v91
    %v96 = vmul.f32 %v28, %v92
    %v97 = vadd.f32 %v93, -28.0
    %v98 = vadd.f32 %v94, -28.0
    %v99 = vadd.f32 %v95, -28.0
    %v100 = vadd.f32 %v96, -28.0
    %v101 = vmul.f32 %v25, %v25
    %v102 = vmul.f32 %v26, %v26
    %v103 = vmul.f32 %v27, %v27
    %v104 = vmul.f32 %v28, %v28
    %v105 = vmul.f32 %v101, %v101
    %v106 = vmul.f32 %v102, %v102
    %v107 = vmul.f32 %v103, %v103
    %v108 = vmul.f32 %v104, %v104
    %v109 = vmul.f32 %v25, %v105
    %v110 = vmul.f32 %v26, %v106
    %v111 = vmul.f32 %v27, %v107
    %v112 = vmul.f32 %v28, %v108
    %v113 = vmul.f32 %v109, %v97
    %v114 = vmul.f32 %v110, %v98
    %v115 = vmul.f32 %v111, %v99
    %v116 = vmul.f32 %v112, %v100
    %vm117 = vcmp.lt.f32.partialorder %v25, 1.0
    %vm118 = vcmp.lt.f32.partialorder %v26, 1.0
    %vm119 = vcmp.lt.f32.partialorder %v27, 1.0
    %vm120 = vcmp.lt.f32.partialorder %v28, 1.0
    %v121 = vadd.f32 %v42, %v113
    %v122 = vadd.f32 %v56, %v114
    %v123 = vadd.f32 %v70, %v115
    %v124 = vadd.f32 %v84, %v116
    %v125 = vsel %vm117, %v121, 0.0
    %v126 = vsel %vm118, %v122, 0.0
    %v127 = vsel %vm119, %v123, 0.0
    %v128 = vsel %vm120, %v124, 0.0
    %129 = vst [vmem:[#allocation5] sm:$0xff] %v125
    %130 = vst [vmem:[#allocation5 + $0x8] sm:$0xff] %v126
    %131 = vst [vmem:[#allocation5 + $0x10] sm:$0xff] %v127
    %132 = vst [vmem:[#allocation5 + $0x18] sm:$0xff] %v128
    // Predicated region
    $region10: #{tpu_custom_call.1} parent=1 // pred_check
      _
    $region11: #{tpu_custom_call.1} parent=1 // pred_check_branch
      %134 = sbr.rel (0) target = $region13
    $region12: #{tpu_custom_call.1} parent=1 // pred_region
      %136 = vsyncadd [#allocation4], 0
      %s137 = sshll.u32 [#allocation5], 4
      %s138 = int_to_ptr.vmem [resolvable:$true] %s137
      %s139 = sshll.u32 %s1, 4
      %s140 = int_to_ptr.hbm [resolvable:$true] %s139
      %145 = dma.vmem_to_hbm [thread:$0]  %s138, 512, %s140, [#allocation4], 256, 256, 16
    $region13: #{tpu_custom_call.1} parent=1 // pred_fallthru
      _
    // Predicated region
    $region14: #{tpu_custom_call.1} parent=1 // pred_check
      _
    $region15: #{tpu_custom_call.1} parent=1 // pred_check_branch
      %147 = sbr.rel (0) target = $region17
    $region16: #{tpu_custom_call.1} parent=1 // pred_region
      %149 = dma.done [#allocation4], 512
    $region17: #{tpu_custom_call.1} parent=1 // pred_fallthru
      _
    %150 = vsyncpa [#allocation3], 1
    %151 = vsyncpa [#allocation4], 1

</llo_original>
